<compile_context>
chip_gen: v7x
topology: tpu7x:2x2x1
jax: 0.10.0
libtpu: 0.0.40
codegen_flags: <defaults>
</compile_context>

<pallas_src>
import functools

import jax
import jax.numpy as jnp
from jax.experimental import pallas as pl
from jax.experimental.pallas import tpu as pltpu


def _dot_loss_kernel(pred_ref, labels_ref, loss_ref, *, epsilon, num_classes):
    """Per-row label-smoothed dot loss for one (TN, C) tile."""
    logits = pred_ref[...].astype(jnp.float32)                   # (TN, C)
    tn, c = logits.shape

    # Numerically stable exp / denom over the class (lane) axis.
    m = jnp.max(logits, axis=-1, keepdims=True)                  # (TN, 1)
    e = jnp.exp(logits - m)                                      # (TN, C)
    denom = jnp.sum(e, axis=-1, keepdims=True)                   # (TN, 1)

    # e[label_i] via masked select + row-sum (no one-hot / targets tensor).
    cls_ids = jax.lax.broadcasted_iota(jnp.int32, (tn, c), 1)
    e_label = jnp.sum(jnp.where(cls_ids == labels_ref[...], e, 0.0),
                      axis=-1, keepdims=True)                    # (TN, 1)

    # (TN, 1)-only divide; approx reciprocal lowers to the EUP slot.
    p_label = e_label * pl.reciprocal(denom, approx=True)
    loss_ref[...] = -((1.0 - epsilon) * p_label + epsilon / num_classes)


def _pick_block_rows(n, c, itemsize, budget_bytes=8 * 1024 * 1024):
    """Largest multiple-of-8 row tile whose double-buffered pred tile fits."""
    max_rows = max(8, budget_bytes // (2 * max(c, 1) * itemsize))
    tn = min(max(n, 8), max_rows, 2048)
    return max(8, (tn // 8) * 8)


def dot_loss(pred, labels, *, epsilon, num_classes=10, reduction=True):
    """Pallas TPU implementation of DotLoss.forward.

    pred:   (N, C) logits, any float dtype (upcast to f32 inside the kernel).
    labels: (N,) integer class ids.
    """
    n, c = pred.shape
    labels2d = labels.reshape(n, 1).astype(jnp.int32)

    tn = _pick_block_rows(n, c, pred.dtype.itemsize)
    grid = (pl.cdiv(n, tn),)

    kernel = functools.partial(
        _dot_loss_kernel,
        epsilon=float(epsilon),
        num_classes=int(num_classes),
    )

    # Per-row losses are always emitted; any reduction happens in the wrapper
    # so the row axis stays fully parallel (no serial accumulator) and Pallas
    # masks stores for the ragged last tile automatically.
    loss_col = pl.pallas_call(
        kernel,
        out_shape=jax.ShapeDtypeStruct((n, 1), jnp.float32),
        grid=grid,
        in_specs=[
            pl.BlockSpec((tn, c), lambda i: (i, 0)),   # pred tile (full class row)
            pl.BlockSpec((tn, 1), lambda i: (i, 0)),   # labels column
        ],
        out_specs=pl.BlockSpec((tn, 1), lambda i: (i, 0)),
        compiler_params=pltpu.CompilerParams(
            dimension_semantics=("parallel",),
            # Above v5e's 16 MiB scoped default, within v6e/v7x budgets; the
            # chosen TN keeps double-buffered tiles comfortably below this.
            vmem_limit_bytes=32 * 1024 * 1024,
        ),
    )(pred, labels2d)
    # TODO(synk): for vocab-scale C where a (tn, C) tile no longer fits VMEM,
    # add a second grid axis over C with an online-softmax accumulation.

    loss = loss_col[:, 0]
    if reduction:
        return jnp.mean(loss)   # divide by the true global N
    return loss


def _reference(pred, labels, *, epsilon, num_classes=10, reduction=True):
    onehot = jax.nn.one_hot(labels, pred.shape[-1], dtype=jnp.float32)
    targets = (1.0 - epsilon) * onehot + epsilon / num_classes
    p = jax.nn.softmax(pred.astype(jnp.float32), axis=-1)
    loss = -jnp.sum(targets * p, axis=-1)
    return loss.mean() if reduction else loss


if __name__ == "__main__":
    key = jax.random.PRNGKey(0)
    kp, kl, kp2, kl2 = jax.random.split(key, 4)

    num_classes = 10
    epsilon = 0.1

    # Small case matching the module defaults (batch=8, C=10).
    batch = 8
    pred = jax.random.normal(kp, (batch, num_classes), dtype=jnp.float32)
    labels = jax.random.randint(kl, (batch,), 0, num_classes, dtype=jnp.int32)

    out = dot_loss(pred, labels, epsilon=epsilon, num_classes=num_classes,
                   reduction=True)
    out = jax.block_until_ready(out)
    ref = _reference(pred, labels, epsilon=epsilon, num_classes=num_classes,
                     reduction=True)
    assert jnp.allclose(out, ref, atol=1e-3, rtol=1e-3), (out, ref)

    out_vec = dot_loss(pred, labels, epsilon=epsilon, num_classes=num_classes,
                       reduction=False)
    out_vec = jax.block_until_ready(out_vec)
    ref_vec = _reference(pred, labels, epsilon=epsilon,
                         num_classes=num_classes, reduction=False)
    assert jnp.allclose(out_vec, ref_vec, atol=1e-3, rtol=1e-3)

    # Ragged case (N not a multiple of the row tile) to exercise partial
    # blocks + the global-N mean.
    batch2 = 37
    pred2 = jax.random.normal(kp2, (batch2, num_classes), dtype=jnp.bfloat16)
    labels2 = jax.random.randint(kl2, (batch2,), 0, num_classes,
                                 dtype=jnp.int32)
    out2 = dot_loss(pred2, labels2, epsilon=epsilon, num_classes=num_classes,
                    reduction=True)
    out2 = jax.block_until_ready(out2)
    ref2 = _reference(pred2, labels2, epsilon=epsilon,
                      num_classes=num_classes, reduction=True)
    assert jnp.allclose(out2, ref2, atol=2e-2, rtol=2e-2), (out2, ref2)

    print("KERNEL_OK")
</pallas_src>

<mosaic_0001>
module attributes {stable_mosaic.version = 11 : i64} {
  func.func @_dot_loss_kernel(%arg0: i32, %arg1: memref<8x10xf32, #tpu.memory_space<vmem>>, %arg2: memref<8x1xi32, #tpu.memory_space<vmem>>, %arg3: memref<8x1xf32, #tpu.memory_space<vmem>>) attributes {dimension_semantics = [#tpu.dimension_semantics<parallel>], iteration_bounds = array<i64: 1>, scalar_prefetch = 0 : i64, scratch_operands = 0 : i64, tpu.core_type = #tpu.core_type<tc>, window_params = [{transform_indices = @transform_0, window_bounds = array<i64: 8, 10>}, {transform_indices = @transform_1, window_bounds = array<i64: 8, 1>}, {transform_indices = @transform_2, window_bounds = array<i64: 8, 1>}]} {
    %c0 = arith.constant 0 : index
    %c0_0 = arith.constant 0 : index
    %0 = vector.load %arg1[%c0, %c0_0] : memref<8x10xf32, #tpu.memory_space<vmem>>, vector<8x10xf32>
    %cst = arith.constant dense<0xFF800000> : vector<8xf32>
    %1 = vector.multi_reduction <maximumf>, %0, %cst [1] : vector<8x10xf32> to vector<8xf32>
    %2 = vector.shape_cast %1 : vector<8xf32> to vector<8x1xf32>
    %3 = vector.broadcast %2 : vector<8x1xf32> to vector<8x10xf32>
    %4 = arith.subf %0, %3 : vector<8x10xf32>
    %5 = math.exp %4 : vector<8x10xf32>
    %cst_1 = arith.constant dense<0.000000e+00> : vector<8xf32>
    %6 = vector.multi_reduction <add>, %5, %cst_1 [1] : vector<8x10xf32> to vector<8xf32>
    %7 = vector.shape_cast %6 : vector<8xf32> to vector<8x1xf32>
    %8 = tpu.iota {dimensions = array<i32: 1>} : vector<8x10xi32>
    %c0_2 = arith.constant 0 : index
    %c0_3 = arith.constant 0 : index
    %9 = vector.load %arg2[%c0_2, %c0_3] : memref<8x1xi32, #tpu.memory_space<vmem>>, vector<8x1xi32>
    %10 = vector.broadcast %9 : vector<8x1xi32> to vector<8x10xi32>
    %11 = arith.cmpi eq, %8, %10 : vector<8x10xi32>
    %cst_4 = arith.constant 0.000000e+00 : f32
    %12 = vector.broadcast %cst_4 : f32 to vector<8x10xf32>
    %13 = arith.select %11, %5, %12 : vector<8x10xi1>, vector<8x10xf32>
    %cst_5 = arith.constant dense<0.000000e+00> : vector<8xf32>
    %14 = vector.multi_reduction <add>, %13, %cst_5 [1] : vector<8x10xf32> to vector<8xf32>
    %15 = vector.shape_cast %14 : vector<8xf32> to vector<8x1xf32>
    %16 = tpu.reciprocal %7 {approx = true} : vector<8x1xf32> -> vector<8x1xf32>
    %17 = arith.mulf %15, %16 : vector<8x1xf32>
    %cst_6 = arith.constant 0.899999976 : f32
    %18 = vector.broadcast %cst_6 : f32 to vector<8x1xf32>
    %19 = arith.mulf %18, %17 : vector<8x1xf32>
    %cst_7 = arith.constant 0.00999999977 : f32
    %20 = vector.broadcast %cst_7 : f32 to vector<8x1xf32>
    %21 = arith.addf %19, %20 : vector<8x1xf32>
    %cst_8 = arith.constant 0.000000e+00 : f32
    %22 = vector.broadcast %cst_8 : f32 to vector<8x1xf32>
    %23 = arith.subf %22, %21 : vector<8x1xf32>
    %c0_9 = arith.constant 0 : index
    %c0_10 = arith.constant 0 : index
    %24 = vector.load %arg3[%c0_9, %c0_10] : memref<8x1xf32, #tpu.memory_space<vmem>>, vector<8x1xf32>
    tpu.vector_store %arg3[%c0_9, %c0_10], %23 {strides = array<i32>} : memref<8x1xf32, #tpu.memory_space<vmem>>, vector<8x1xf32>,
    return
  }
  func.func @transform_0(%arg0: i32) -> (i32, i32) {
    %c0_i32 = arith.constant 0 : i32
    %c0_i32_0 = arith.constant 0 : i32
    return %arg0, %c0_i32 : i32, i32
  }
  func.func @transform_1(%arg0: i32) -> (i32, i32) {
    %c0_i32 = arith.constant 0 : i32
    %c0_i32_0 = arith.constant 0 : i32
    return %arg0, %c0_i32 : i32, i32
  }
  func.func @transform_2(%arg0: i32) -> (i32, i32) {
    %c0_i32 = arith.constant 0 : i32
    %c0_i32_0 = arith.constant 0 : i32
    return %arg0, %c0_i32 : i32, i32
  }
}

</mosaic_0001>

<llo_original>
// kernel: tpu_custom_call.1
$region0: #{tpu_custom_call.1}
  #allocation0 [shape = 'u32[]', space=smem, size = 0x4, offset = 0x4, fixed_abs, tag = 'smem constant byte address 0x4 - core index']
  #allocation1 [shape = 'u32[144,128]{1,0:T(1,128)}', space=vmem, size = 0x12000, scoped, tag = 'internal scratch']
  %s0 = inlined_call_operand.vmem [shape: f32[8,10], index: 0, kind: input, shape index: {}]
  %s1 = inlined_call_operand.vmem [shape: s32[8,1], index: 1, kind: input, shape index: {}]
  %s2 = inlined_call_operand.vmem [shape: f32[8,1], index: 2, kind: output, shape index: {}]
  %s3 = sld [smem:[#allocation0]]
  $region18: #{tpu_custom_call.1} parent=0
    _
  %s5 = ssub.s32 1, %s3
  %s6 = scalar_select 0, %s5, %s3
  // Predicated region
  $region2: #{tpu_custom_call.1} parent=0 // pred_check
    _
  $region3: #{tpu_custom_call.1} parent=0 // pred_check_branch
    %8 = sbr.rel (0) target = $region5
  $region4: #{tpu_custom_call.1} parent=0 // pred_region
    _
  $region5: #{tpu_custom_call.1} parent=0 // pred_fallthru
    _
  // Predicated region
  $region6: #{tpu_custom_call.1} parent=0 // pred_check
    _
  $region7: #{tpu_custom_call.1} parent=0 // pred_check_branch
    %10 = sbr.rel (0) target = $region9
  $region8: #{tpu_custom_call.1} parent=0 // pred_region
    _
  $region9: #{tpu_custom_call.1} parent=0 // pred_fallthru
    _
  %v11 = vld [vmem:[%s0] sm:$0xff]
  %vm12 = vcmask 80896
  %v13 = vsel %vm12, %v11, -inf
  %14 = vmax.xlane.f32.xlu0 %v13
  %v15 = vpop.xlane.xlu0 %14
  %v16 = vsub.f32 %v11, %v15
  %v17 = vmul.f32 %v16, 1.442695
  %v18 = vpow.pop %v17
  %v19 = vsel %vm12, %v18, 0.0
  %20 = vadd.xlane.f32.xlu0 %v19
  %v21 = vpop.xlane.xlu0 %20
  %v22 = vlaneseq
  %v23 = vand.u32 %v22, 127
  %v24 = vld [vmem:[%s1] sm:$0xff]
  %25 = vset.pattern.permute.xlu0 0
  %26 = vperm.xlu0 %25, %v24
  %v27 = vpop.permute.xlu0 %26
  %vm28 = vcmp.eq.s32.totalorder %v23, %v27
  %v29 = vsel %vm28, %v18, 0.0
  %v30 = vsel %vm12, %v29, 0.0
  %31 = vadd.xlane.f32.xlu0 %v30
  %v32 = vpop.xlane.xlu0 %31
  %v33 = vrcp.pop %v21
  %v34 = vmul.f32 %v32, %v33
  %v35 = vmul.f32 %v34, 0.9
  %v36 = vadd.f32 %v35, 0.01
  %v37 = vsub.f32 0.0, %v36
  %vm38 = vcmask 7168
  %39 = vst.msk [vmem:[%s2] sm:$0xff] %vm38, %v37
  // Predicated region
  $region10: #{tpu_custom_call.1} parent=0 // pred_check
    _
  $region11: #{tpu_custom_call.1} parent=0 // pred_check_branch
    %41 = sbr.rel (0) target = $region13
  $region12: #{tpu_custom_call.1} parent=0 // pred_region
    _
  $region13: #{tpu_custom_call.1} parent=0 // pred_fallthru
    _
  // Predicated region
  $region14: #{tpu_custom_call.1} parent=0 // pred_check
    _
  $region15: #{tpu_custom_call.1} parent=0 // pred_check_branch
    %43 = sbr.rel (0) target = $region17
  $region16: #{tpu_custom_call.1} parent=0 // pred_region
    _
  $region17: #{tpu_custom_call.1} parent=0 // pred_fallthru
    _

</llo_original>
